<compile_context>
chip_gen: v5e
topology: v5e:2x2
jax: 0.10.0
libtpu: 0.0.40
codegen_flags: <defaults>
</compile_context>

<pallas_src>
import jax
import jax.numpy as jnp
from jax.experimental import pallas as pl
from jax.experimental.pallas import tpu as pltpu

B, IN, OUT = 2, 16, 2  # torch.nn.Linear(16, 2) applied to a (2, 16) input


def _linear_relu_kernel(slab_ref, o_ref):
    """Fused Linear(IN->OUT) + ReLU on one packed VMEM slab.

    Slab layout (all rows have width IN):
      rows [0, B)        : x        (B, IN)
      rows [B, B+OUT)    : weight   (OUT, IN)  -- torch nn.Linear layout
      row  B+OUT         : bias in lanes [0, OUT), rest zero
    """
    x = slab_ref[0:B, :]                                  # (B, IN)
    # VPU path: 128 MACs total -- skip the MXU entirely. Python loop is
    # unrolled at trace time (OUT == 2).
    cols = []
    for o in range(OUT):
        w_o = slab_ref[B + o:B + o + 1, :]                # (1, IN), sublane-broadcast
        cols.append(jnp.sum(x * w_o, axis=-1, keepdims=True))   # (B, 1)
    bias = slab_ref[B + OUT:B + OUT + 1, 0:OUT]           # (1, OUT)
    v1 = jnp.concatenate(cols, axis=-1) + bias            # (B, OUT)
    o_ref[...] = jnp.maximum(v1, 0.0)                     # ReLU


def pack_params(weight, bias):
    """Static param rows (OUT+1, IN): weight rows + a bias row.

    Hoisted out of the per-call path (parameter prep time).
    """
    bias_row = jnp.zeros((1, IN), jnp.float32).at[0, :OUT].set(bias.astype(jnp.float32))
    return jnp.concatenate([weight.astype(jnp.float32), bias_row], axis=0)


@jax.jit
def linear_relu(x, param_rows):
    # One input slab -> one input DMA (x + weight + bias collapse into a
    # single (B+OUT+1, IN) array; fits in a fraction of one (8,128) vreg).
    slab = jnp.concatenate([x.astype(jnp.float32), param_rows], axis=0)
    flops = 2 * B * IN * OUT
    bytes_accessed = 4 * (slab.size + B * OUT)
    return pl.pallas_call(
        _linear_relu_kernel,
        out_shape=jax.ShapeDtypeStruct((B, OUT), jnp.float32),
        in_specs=[pl.BlockSpec(memory_space=pltpu.MemorySpace.VMEM)],
        out_specs=pl.BlockSpec(memory_space=pltpu.MemorySpace.VMEM),
        cost_estimate=pl.CostEstimate(
            flops=flops, bytes_accessed=bytes_accessed, transcendentals=0
        ),
    )(slab)


if __name__ == "__main__":
    # Input exactly as in the PyTorch script: shape (2, 16)
    x0 = jnp.zeros((B, IN), dtype=jnp.float32)
    x0 = x0.at[0, 0].set(1.0).at[1, 2].set(1.0)

    # Deterministic parameter init (torch.nn.Linear(16, 2) shapes)
    key = jax.random.PRNGKey(0)
    kw, kb = jax.random.split(key)
    bound = 1.0 / jnp.sqrt(float(IN))
    weight = jax.random.uniform(kw, (OUT, IN), jnp.float32, -bound, bound)
    bias = jax.random.uniform(kb, (OUT,), jnp.float32, -bound, bound)

    param_rows = pack_params(weight, bias)  # hoisted: done once, not per call

    out = linear_relu(x0, param_rows)
    out = jax.block_until_ready(out)

    # Reference check in plain JAX
    ref = jnp.maximum(x0 @ weight.T + bias, 0.0)
    assert jnp.allclose(out, ref, atol=1e-6), (out, ref)
    print("KERNEL_OK")
</pallas_src>

<mosaic_0001>
module attributes {stable_mosaic.version = 11 : i64} {
  func.func @_linear_relu_kernel(%arg0: memref<5x16xf32, #tpu.memory_space<vmem>>, %arg1: memref<2x2xf32, #tpu.memory_space<vmem>>) attributes {dimension_semantics = [], scalar_prefetch = 0 : i64, scratch_operands = 0 : i64, tpu.core_type = #tpu.core_type<tc>} {
    %c0 = arith.constant 0 : index
    %c0_0 = arith.constant 0 : index
    %0 = vector.load %arg0[%c0, %c0_0] : memref<5x16xf32, #tpu.memory_space<vmem>>, vector<2x16xf32>
    %c2 = arith.constant 2 : index
    %c0_1 = arith.constant 0 : index
    %1 = vector.load %arg0[%c2, %c0_1] : memref<5x16xf32, #tpu.memory_space<vmem>>, vector<1x16xf32>
    %2 = vector.broadcast %1 : vector<1x16xf32> to vector<2x16xf32>
    %3 = arith.mulf %0, %2 : vector<2x16xf32>
    %cst = arith.constant dense<0.000000e+00> : vector<2xf32>
    %4 = vector.multi_reduction <add>, %3, %cst [1] : vector<2x16xf32> to vector<2xf32>
    %5 = vector.shape_cast %4 : vector<2xf32> to vector<2x1xf32>
    %c3 = arith.constant 3 : index
    %c0_2 = arith.constant 0 : index
    %6 = vector.load %arg0[%c3, %c0_2] : memref<5x16xf32, #tpu.memory_space<vmem>>, vector<1x16xf32>
    %7 = vector.broadcast %6 : vector<1x16xf32> to vector<2x16xf32>
    %8 = arith.mulf %0, %7 : vector<2x16xf32>
    %cst_3 = arith.constant dense<0.000000e+00> : vector<2xf32>
    %9 = vector.multi_reduction <add>, %8, %cst_3 [1] : vector<2x16xf32> to vector<2xf32>
    %10 = vector.shape_cast %9 : vector<2xf32> to vector<2x1xf32>
    %c4 = arith.constant 4 : index
    %c0_4 = arith.constant 0 : index
    %11 = vector.load %arg0[%c4, %c0_4] : memref<5x16xf32, #tpu.memory_space<vmem>>, vector<1x2xf32>
    %12 = tpu.concatenate %5, %10 in 1 : vector<2x1xf32>, vector<2x1xf32> -> vector<2x2xf32>
    %13 = vector.broadcast %11 : vector<1x2xf32> to vector<2x2xf32>
    %14 = arith.addf %12, %13 : vector<2x2xf32>
    %cst_5 = arith.constant 0.000000e+00 : f32
    %15 = vector.broadcast %cst_5 : f32 to vector<2x2xf32>
    %16 = arith.maximumf %14, %15 : vector<2x2xf32>
    %c0_6 = arith.constant 0 : index
    %c0_7 = arith.constant 0 : index
    %17 = vector.load %arg1[%c0_6, %c0_7] : memref<2x2xf32, #tpu.memory_space<vmem>>, vector<2x2xf32>
    tpu.vector_store %arg1[%c0_6, %c0_7], %16 {strides = array<i32>} : memref<2x2xf32, #tpu.memory_space<vmem>>, vector<2x2xf32>,
    return
  }
}

</mosaic_0001>

<llo_original>
// kernel: linear_relu.1
$region0: #{linear_relu.1}
  #allocation0 [shape = 'u32[]', space=smem, size = 0x4, offset = 0x4, fixed_abs, tag = 'smem constant byte address 0x4 - core index']
  #allocation1 [shape = 'u32[72,128]{1,0:T(1,128)}', space=vmem, size = 0x9000, scoped, tag = 'internal scratch']
  %s0 = inlined_call_operand.vmem [shape: f32[5,16], index: 0, kind: input, shape index: {}]
  %s1 = inlined_call_operand.hbm [shape: f32[2,2], index: 1, kind: output, shape index: {}]
  %s2 = sld [smem:[#allocation0]]
  $region14: #{linear_relu.1} parent=0
    _
  %s4 = ssub.s32 1, %s2
  %s5 = scalar_select 0, %s4, %s2
  $region1: #{linear_relu.1} parent=0
    #allocation2 [shape = 'u8[1024]{0}', space=vmem, size = 0x400, scoped, tag = 'output window, operand 0, single buffered']
    #allocation3 [shape = 's32[1]{0}', space=sflag, size = 0x4, scoped, tag = 'scoped memory for linear_relu.1']
    %6 = vsyncpa [#allocation3], 0
    // Predicated region
    $region2: #{linear_relu.1} parent=1 // pred_check
      _
    $region3: #{linear_relu.1} parent=1 // pred_check_branch
      %8 = sbr.rel (0) target = $region5
    $region4: #{linear_relu.1} parent=1 // pred_region
      _
    $region5: #{linear_relu.1} parent=1 // pred_fallthru
      _
    %v9 = vld [vmem:[%s0] sm:$0x3]
    %v10 = vld [vmem:[%s0 + $0x2] sm:$0x1]
    %v11 = vperm.slane %v10, 0
    %v12 = vmul.f32 %v9, %v11
    %vm13 = vcmask 123904
    %v14 = vsel %vm13, %v12, 0.0
    %15 = vadd.xlane.f32.xlu0 %v14
    %v16 = vpop.xlane.xlu0 %15
    %v17 = vld [vmem:[%s0 + $0x3] sm:$0x1]
    %v18 = vperm.slane %v17, 0
    %v19 = vmul.f32 %v9, %v18
    %v20 = vsel %vm13, %v19, 0.0
    %21 = vadd.xlane.f32.xlu0 %v20
    %v22 = vpop.xlane.xlu0 %21
    %v23 = vld [vmem:[%s0 + $0x4] sm:$0x1]
    %vm24 = vcmask 7168
    %v25 = vsel %vm24, %v16, %v22
    %v26 = vperm.slane %v23, 0
    %v27 = vadd.f32 %v25, %v26
    %v28 = vmax.f32 %v27, 0.0
    %vm29 = vcmask 9216
    %30 = vst.msk [vmem:[#allocation2] sm:$0x3] %vm29, %v28
    // Predicated region
    $region6: #{linear_relu.1} parent=1 // pred_check
      _
    $region7: #{linear_relu.1} parent=1 // pred_check_branch
      %32 = sbr.rel (0) target = $region9
    $region8: #{linear_relu.1} parent=1 // pred_region
      %34 = vsyncadd [#allocation3], 0
      %s36 = sshll.u32 [#allocation2], 4
      %s37 = int_to_ptr.vmem [resolvable:$true] %s36
      %s38 = sshll.u32 %s1, 4
      %s39 = int_to_ptr.hbm [resolvable:$true] %s38
      %41 = dma.vmem_to_hbm [thread:$0]  %s37, 32, %s39, [#allocation3]
    $region9: #{linear_relu.1} parent=1 // pred_fallthru
      _
    // Predicated region
    $region10: #{linear_relu.1} parent=1 // pred_check
      _
    $region11: #{linear_relu.1} parent=1 // pred_check_branch
      %43 = sbr.rel (0) target = $region13
    $region12: #{linear_relu.1} parent=1 // pred_region
      %45 = dma.done [#allocation3], 32
    $region13: #{linear_relu.1} parent=1 // pred_fallthru
      _
    %46 = vsyncpa [#allocation3], 1

</llo_original>
